<compile_context>
chip_gen: v5e
topology: v5e:2x2
jax: 0.10.0
libtpu: 0.0.40
codegen_flags: <defaults>
</compile_context>

<pallas_src>
import jax
import jax.numpy as jnp
from jax.experimental import pallas as pl
from jax.experimental.pallas import tpu as pltpu

IN_FEATURES = 32
OUT_FEATURES = 10

LANE = 128          # lane-dense output width (multiple of 128)
MAX_TM = 2048       # row-tile cap (multiple of 8)
MIN_SPLIT_TM = 512  # only split rows across >=2 tiles when each tile keeps >= this many rows


def _round_up(v, m):
    return (v + m - 1) // m * m


def _cdiv(a, b):
    return -(-a // b)


def _choose_row_tiling(M):
    """Pick (tm, grid_m). Big tiles amortize per-grid-step overhead; when there
    is enough work, force an even grid_m >= 2 so the 'parallel' axis actually
    shards across v7x's two TensorCores (no-op on v5e/v6e, 1 TC)."""
    n_tiles = _cdiv(M, MAX_TM)
    if M >= 2 * MIN_SPLIT_TM:
        if n_tiles < 2:
            n_tiles = 2
        elif n_tiles % 2 == 1:
            n_tiles += 1
    tm = _round_up(_cdiv(M, n_tiles), 8)
    grid_m = _cdiv(M, tm)
    return tm, grid_m


def linear_kernel(x_ref, w_ref, b_ref, o_ref):
    # x_ref: (TM, K) f32 -> bf16 cast in-kernel (saves a wrapper HBM pass).
    # w_ref: (K, N_pad) bf16, lane-dense, resident across the grid.
    # b_ref: (1, N_pad) f32.  o_ref: (TM, N_pad) out dtype.
    x_bf16 = x_ref[...].astype(jnp.bfloat16)
    acc = jnp.dot(x_bf16, w_ref[...], preferred_element_type=jnp.float32)
    o_ref[...] = (acc + b_ref[...]).astype(o_ref.dtype)


def liner_forward(x, weight, bias):
    """nn.Linear on the last dim: x (..., K) @ weight(N, K)^T + bias(N)."""
    if not jnp.issubdtype(x.dtype, jnp.floating):
        raise TypeError(f"liner_forward expects a floating input, got {x.dtype}")
    lead_shape = x.shape[:-1]
    K = x.shape[-1]
    N = weight.shape[0]
    M = 1
    for d in lead_shape:
        M *= d
    out_dtype = x.dtype

    n_pad = _round_up(N, LANE)
    tm, grid_m = _choose_row_tiling(M)

    x2d = x.reshape(M, K)  # stays f32; cast happens inside the kernel

    # One-time weight pre-transpose + pad to (K, n_pad): lane-dense MXU RHS.
    w_t = jnp.pad(weight.T.astype(jnp.bfloat16), ((0, 0), (0, n_pad - N)))
    b2d = jnp.pad(bias.astype(jnp.float32), ((0, n_pad - N),)).reshape(1, n_pad)

    out_itemsize = jnp.dtype(out_dtype).itemsize
    cost = pl.CostEstimate(
        flops=2 * M * K * n_pad,
        transcendentals=0,
        bytes_accessed=(x2d.size * x2d.dtype.itemsize + w_t.size * 2
                        + b2d.size * 4 + M * n_pad * out_itemsize),
    )

    out2d = pl.pallas_call(
        linear_kernel,
        out_shape=jax.ShapeDtypeStruct((M, n_pad), out_dtype),
        grid=(grid_m,),
        in_specs=[
            pl.BlockSpec((tm, K), lambda i: (i, 0)),      # x row tile (ragged last block OK)
            pl.BlockSpec((K, n_pad), lambda i: (0, 0)),   # full weight, resident
            pl.BlockSpec((1, n_pad), lambda i: (0, 0)),   # bias, resident
        ],
        out_specs=pl.BlockSpec((tm, n_pad), lambda i: (i, 0)),
        compiler_params=pltpu.CompilerParams(
            dimension_semantics=("parallel",),            # megacore shard on v7x
            # ~2.6 MiB/tile double-buffered even at TM=2048 -> 32 MiB is safe
            # on v5e/v6e/v7x; raise on v6e/v5e only if tiles are made larger.
            vmem_limit_bytes=32 * 1024 * 1024,
        ),
        cost_estimate=cost,
    )(x2d, w_t, b2d)

    # TODO(synk): at model scope, hand the padded (M, 128) slab to the consumer
    # (or fuse the consumer) instead of paying this column-slice read-back.
    return out2d[:, :N].reshape(*lead_shape, N)


if __name__ == "__main__":
    key = jax.random.PRNGKey(0)
    k_x, k_w, k_b = jax.random.split(key, 3)

    # Small image-like input: batch=2, channels=4, height=16, width=IN_FEATURES.
    x = jax.random.normal(k_x, (2, 4, 16, IN_FEATURES), dtype=jnp.float32)

    # Deterministic nn.Linear-style init: U(-1/sqrt(in), 1/sqrt(in))
    bound = 1.0 / (IN_FEATURES ** 0.5)
    weight = jax.random.uniform(
        k_w, (OUT_FEATURES, IN_FEATURES), minval=-bound, maxval=bound,
        dtype=jnp.float32)
    bias = jax.random.uniform(
        k_b, (OUT_FEATURES,), minval=-bound, maxval=bound, dtype=jnp.float32)

    out = liner_forward(x, weight, bias)
    out = jax.block_until_ready(out)

    # Correctness: tight check against a reference using the same bf16-rounded
    # operands (f32 accumulate), plus a loose check against pure-f32 math.
    xb = x.astype(jnp.bfloat16).astype(jnp.float32)
    wb = weight.astype(jnp.bfloat16).astype(jnp.float32)
    ref_bf16 = jnp.einsum("bchw,ow->bcho", xb, wb) + bias
    ref_f32 = jnp.einsum("bchw,ow->bcho", x, weight) + bias

    assert out.shape == (2, 4, 16, OUT_FEATURES), out.shape
    assert jnp.allclose(out, ref_bf16, atol=1e-3, rtol=1e-3), "mismatch vs bf16 reference"
    assert jnp.allclose(out, ref_f32, atol=5e-2, rtol=5e-2), "mismatch vs f32 reference"

    print("KERNEL_OK")
</pallas_src>

<mosaic_0001>
module attributes {stable_mosaic.version = 11 : i64} {
  func.func @linear_kernel(%arg0: i32, %arg1: memref<128x32xf32, #tpu.memory_space<vmem>>, %arg2: memref<32x128xbf16, #tpu.memory_space<vmem>>, %arg3: memref<1x128xf32, #tpu.memory_space<vmem>>, %arg4: memref<128x128xf32, #tpu.memory_space<vmem>>) attributes {dimension_semantics = [#tpu.dimension_semantics<parallel>], iteration_bounds = array<i64: 1>, scalar_prefetch = 0 : i64, scratch_operands = 0 : i64, tpu.core_type = #tpu.core_type<tc>, window_params = [{transform_indices = @transform_0, window_bounds = array<i64: 128, 32>}, {pipeline_mode = #tpu.pipeline_mode<synchronous>, transform_indices = @transform_1, window_bounds = array<i64: 32, 128>}, {pipeline_mode = #tpu.pipeline_mode<synchronous>, transform_indices = @transform_2, window_bounds = array<i64: 1, 128>}, {transform_indices = @transform_3, window_bounds = array<i64: 128, 128>}]} {
    %c0 = arith.constant 0 : index
    %c0_0 = arith.constant 0 : index
    %0 = vector.load %arg1[%c0, %c0_0] : memref<128x32xf32, #tpu.memory_space<vmem>>, vector<128x32xf32>
    %1 = arith.truncf %0 : vector<128x32xf32> to vector<128x32xbf16>
    %c0_1 = arith.constant 0 : index
    %c0_2 = arith.constant 0 : index
    %2 = vector.load %arg2[%c0_1, %c0_2] : memref<32x128xbf16, #tpu.memory_space<vmem>>, vector<32x128xbf16>
    %cst = arith.constant dense<0.000000e+00> : vector<128x128xf32>
    %3 = tpu.matmul %1, %2, %cst {dimension_numbers = #tpu.dot_dimension_numbers<[1], [0], [0], [1], [0, 0, 1, 1], [], []>} : vector<128x32xbf16>, vector<32x128xbf16>, vector<128x128xf32> -> vector<128x128xf32>
    %c0_3 = arith.constant 0 : index
    %c0_4 = arith.constant 0 : index
    %4 = vector.load %arg3[%c0_3, %c0_4] : memref<1x128xf32, #tpu.memory_space<vmem>>, vector<1x128xf32>
    %5 = vector.broadcast %4 : vector<1x128xf32> to vector<128x128xf32>
    %6 = arith.addf %3, %5 : vector<128x128xf32>
    %c0_5 = arith.constant 0 : index
    %c0_6 = arith.constant 0 : index
    %7 = vector.load %arg4[%c0_5, %c0_6] : memref<128x128xf32, #tpu.memory_space<vmem>>, vector<128x128xf32>
    tpu.vector_store %arg4[%c0_5, %c0_6], %6 {strides = array<i32>} : memref<128x128xf32, #tpu.memory_space<vmem>>, vector<128x128xf32>,
    return
  }
  func.func @transform_0(%arg0: i32) -> (i32, i32) {
    %c0_i32 = arith.constant 0 : i32
    %c0_i32_0 = arith.constant 0 : i32
    return %arg0, %c0_i32 : i32, i32
  }
  func.func @transform_1(%arg0: i32) -> (i32, i32) {
    %c0_i32 = arith.constant 0 : i32
    %c0_i32_0 = arith.constant 0 : i32
    %c0_i32_1 = arith.constant 0 : i32
    return %c0_i32, %c0_i32_0 : i32, i32
  }
  func.func @transform_2(%arg0: i32) -> (i32, i32) {
    %c0_i32 = arith.constant 0 : i32
    %c0_i32_0 = arith.constant 0 : i32
    %c0_i32_1 = arith.constant 0 : i32
    return %c0_i32, %c0_i32_0 : i32, i32
  }
  func.func @transform_3(%arg0: i32) -> (i32, i32) {
    %c0_i32 = arith.constant 0 : i32
    %c0_i32_0 = arith.constant 0 : i32
    return %arg0, %c0_i32 : i32, i32
  }
}

</mosaic_0001>

<llo_original>
// kernel: tpu_custom_call.1
$region0: #{tpu_custom_call.1}
  #allocation0 [shape = 'u32[]', space=smem, size = 0x4, offset = 0x4, fixed_abs, tag = 'smem constant byte address 0x4 - core index']
  #allocation1 [shape = 'u32[72,128]{1,0:T(1,128)}', space=vmem, size = 0x9000, scoped, tag = 'internal scratch']
  %s0 = inlined_call_operand.vmem [shape: f32[128,32], index: 0, kind: input, shape index: {}]
  %s1 = inlined_call_operand.vmem [shape: bf16[32,128], index: 1, kind: input, shape index: {}]
  %s2 = inlined_call_operand.vmem [shape: f32[1,128], index: 2, kind: input, shape index: {}]
  %s3 = inlined_call_operand.hbm [shape: f32[128,128], index: 3, kind: output, shape index: {}]
  %s4 = sld [smem:[#allocation0]]
  $region22: #{tpu_custom_call.1} parent=0
    _
  %s6 = ssub.s32 1, %s4
  %s7 = scalar_select 0, %s6, %s4
  $region1: #{tpu_custom_call.1} parent=0
    #allocation2 [shape = 'u8[65536]{0}', space=vmem, size = 0x10000, scoped, tag = 'output window, operand 0, single buffered']
    #allocation3 [shape = 's32[1]{0}', space=sflag, size = 0x4, scoped, tag = 'scoped memory for tpu_custom_call.1']
    %8 = vsyncpa [#allocation3], 0
    // Predicated region
    $region2: #{tpu_custom_call.1} parent=1 // pred_check
      _
    $region3: #{tpu_custom_call.1} parent=1 // pred_check_branch
      %10 = sbr.rel (0) target = $region5
    $region4: #{tpu_custom_call.1} parent=1 // pred_region
      _
    $region5: #{tpu_custom_call.1} parent=1 // pred_fallthru
      _
    // Predicated region
    $region6: #{tpu_custom_call.1} parent=1 // pred_check
      _
    $region7: #{tpu_custom_call.1} parent=1 // pred_check_branch
      %12 = sbr.rel (0) target = $region9
    $region8: #{tpu_custom_call.1} parent=1 // pred_region
      _
    $region9: #{tpu_custom_call.1} parent=1 // pred_fallthru
      _
    // Predicated region
    $region10: #{tpu_custom_call.1} parent=1 // pred_check
      _
    $region11: #{tpu_custom_call.1} parent=1 // pred_check_branch
      %14 = sbr.rel (0) target = $region13
    $region12: #{tpu_custom_call.1} parent=1 // pred_region
      _
    $region13: #{tpu_custom_call.1} parent=1 // pred_fallthru
      _
    %v16 = vld [vmem:[%s0] sm:$0xff]
    %v17 = vld [vmem:[%s0 + $0x8] sm:$0xff]
    %v18 = vld [vmem:[%s0 + $0x10] sm:$0xff]
    %v19 = vld [vmem:[%s0 + $0x18] sm:$0xff]
    %v20 = vld [vmem:[%s0 + $0x20] sm:$0xff]
    %v21 = vld [vmem:[%s0 + $0x28] sm:$0xff]
    %v22 = vld [vmem:[%s0 + $0x30] sm:$0xff]
    %v23 = vld [vmem:[%s0 + $0x38] sm:$0xff]
    %v24 = vld [vmem:[%s0 + $0x40] sm:$0xff]
    %v25 = vld [vmem:[%s0 + $0x48] sm:$0xff]
    %v26 = vld [vmem:[%s0 + $0x50] sm:$0xff]
    %v27 = vld [vmem:[%s0 + $0x58] sm:$0xff]
    %v28 = vld [vmem:[%s0 + $0x60] sm:$0xff]
    %v29 = vld [vmem:[%s0 + $0x68] sm:$0xff]
    %v30 = vld [vmem:[%s0 + $0x70] sm:$0xff]
    %v31 = vld [vmem:[%s0 + $0x78] sm:$0xff]
    %v32 = vpack.c.bf16 %v17, %v16
    %v33 = vpack.c.bf16 %v19, %v18
    %v34 = vpack.c.bf16 %v21, %v20
    %v35 = vpack.c.bf16 %v23, %v22
    %v36 = vpack.c.bf16 %v25, %v24
    %v37 = vpack.c.bf16 %v27, %v26
    %v38 = vpack.c.bf16 %v29, %v28
    %v39 = vpack.c.bf16 %v31, %v30
    %v40 = vld [vmem:[%s1] sm:$0xf]
    %v41 = vld [vmem:[%s1 + $0x4] sm:$0xf]
    %v42 = vld [vmem:[%s1 + $0x8] sm:$0xf]
    %v43 = vld [vmem:[%s1 + $0xc] sm:$0xf]
    %v44 = vld [vmem:[%s2] sm:$0x1]
    %v46 = vperm.slane %v44, 0
    %v52 = vunpack.c.l.b16 %v40
    %v53 = vunpack.c.l.b16 %v41
    %v54 = vunpack.c.l.b16 %v42
    %v55 = vunpack.c.l.b16 %v43
    %v56 = vpack.c.b16 %v53, %v52
    %v57 = vpack.c.b16 %v55, %v54
    %vm60 = vcmask 261120
    %v62 = vsel %vm60, %v32, 0
    %v65 = vsel %vm60, %v33, 0
    %v68 = vsel %vm60, %v34, 0
    %v71 = vsel %vm60, %v35, 0
    %v74 = vsel %vm60, %v36, 0
    %v77 = vsel %vm60, %v37, 0
    %v80 = vsel %vm60, %v38, 0
    %v83 = vsel %vm60, %v39, 0
    %85 = vmatpush.bf16.msra.mxu0 0
    %86 = vmatpush.bf16.msra.mxu0 0
    %87 = vmatpush.bf16.msra.mxu0 0
    %88 = vmatpush.bf16.msra.mxu0 0
    %89 = vmatpush.bf16.msra.mxu0 0
    %90 = vmatpush.bf16.msra.mxu0 0
    %91 = vmatpush.bf16.msra.mxu0 %v57
    %92 = vmatpush.bf16.msra.mxu0 %v56
    %93 = vmatmul.bf16.gmra.mxu0 %v62
    %v94 = vpop.f32.mrf.mxu0
    %v95 = vadd.f32 %v46, %v94
    %v96 = vpop.f32.mrf.mxu0
    %v97 = vadd.f32 %v46, %v96
    %98 = vmatmul.bf16.gmra.mxu0 %v65
    %v99 = vpop.f32.mrf.mxu0
    %v100 = vadd.f32 %v46, %v99
    %v101 = vpop.f32.mrf.mxu0
    %v102 = vadd.f32 %v46, %v101
    %103 = vmatmul.bf16.gmra.mxu0 %v68
    %v104 = vpop.f32.mrf.mxu0
    %v105 = vadd.f32 %v46, %v104
    %v106 = vpop.f32.mrf.mxu0
    %v107 = vadd.f32 %v46, %v106
    %108 = vmatmul.bf16.gmra.mxu0 %v71
    %v109 = vpop.f32.mrf.mxu0
    %v110 = vadd.f32 %v46, %v109
    %v111 = vpop.f32.mrf.mxu0
    %v112 = vadd.f32 %v46, %v111
    %113 = vmatmul.bf16.gmra.mxu0 %v74
    %v114 = vpop.f32.mrf.mxu0
    %v115 = vadd.f32 %v46, %v114
    %v116 = vpop.f32.mrf.mxu0
    %v117 = vadd.f32 %v46, %v116
    %118 = vmatmul.bf16.gmra.mxu0 %v77
    %v119 = vpop.f32.mrf.mxu0
    %v120 = vadd.f32 %v46, %v119
    %v121 = vpop.f32.mrf.mxu0
    %v122 = vadd.f32 %v46, %v121
    %123 = vmatmul.bf16.gmra.mxu0 %v80
    %v124 = vpop.f32.mrf.mxu0
    %v125 = vadd.f32 %v46, %v124
    %v126 = vpop.f32.mrf.mxu0
    %v127 = vadd.f32 %v46, %v126
    %128 = vmatmul.bf16.gmra.mxu0 %v83
    %v129 = vpop.f32.mrf.mxu0
    %v130 = vadd.f32 %v46, %v129
    %v131 = vpop.f32.mrf.mxu0
    %v132 = vadd.f32 %v46, %v131
    %133 = vdwg.mxu0
    %134 = vst [vmem:[#allocation2] sm:$0xff] %v95
    %135 = vst [vmem:[#allocation2 + $0x8] sm:$0xff] %v97
    %136 = vst [vmem:[#allocation2 + $0x10] sm:$0xff] %v100
    %137 = vst [vmem:[#allocation2 + $0x18] sm:$0xff] %v102
    %138 = vst [vmem:[#allocation2 + $0x20] sm:$0xff] %v105
    %139 = vst [vmem:[#allocation2 + $0x28] sm:$0xff] %v107
    %140 = vst [vmem:[#allocation2 + $0x30] sm:$0xff] %v110
    %141 = vst [vmem:[#allocation2 + $0x38] sm:$0xff] %v112
    %142 = vst [vmem:[#allocation2 + $0x40] sm:$0xff] %v115
    %143 = vst [vmem:[#allocation2 + $0x48] sm:$0xff] %v117
    %144 = vst [vmem:[#allocation2 + $0x50] sm:$0xff] %v120
    %145 = vst [vmem:[#allocation2 + $0x58] sm:$0xff] %v122
    %146 = vst [vmem:[#allocation2 + $0x60] sm:$0xff] %v125
    %147 = vst [vmem:[#allocation2 + $0x68] sm:$0xff] %v127
    %148 = vst [vmem:[#allocation2 + $0x70] sm:$0xff] %v130
    %149 = vst [vmem:[#allocation2 + $0x78] sm:$0xff] %v132
    // Predicated region
    $region14: #{tpu_custom_call.1} parent=1 // pred_check
      _
    $region15: #{tpu_custom_call.1} parent=1 // pred_check_branch
      %151 = sbr.rel (0) target = $region17
    $region16: #{tpu_custom_call.1} parent=1 // pred_region
      %153 = vsyncadd [#allocation3], 0
      %s154 = sshll.u32 [#allocation2], 4
      %s155 = int_to_ptr.vmem [resolvable:$true] %s154
      %s156 = sshll.u32 %s3, 4
      %s157 = int_to_ptr.hbm [resolvable:$true] %s156
      %162 = dma.vmem_to_hbm [thread:$0]  %s155, 2048, %s157, [#allocation3], 128, 128, 8
    $region17: #{tpu_custom_call.1} parent=1 // pred_fallthru
      _
    // Predicated region
    $region18: #{tpu_custom_call.1} parent=1 // pred_check
      _
    $region19: #{tpu_custom_call.1} parent=1 // pred_check_branch
      %164 = sbr.rel (0) target = $region21
    $region20: #{tpu_custom_call.1} parent=1 // pred_region
      %166 = dma.done [#allocation3], 2048
    $region21: #{tpu_custom_call.1} parent=1 // pred_fallthru
      _
    %167 = vsyncpa [#allocation3], 1

</llo_original>
